<compile_context>
chip_gen: v7x
topology: tpu7x:2x2x1
jax: 0.10.0
libtpu: 0.0.40
codegen_flags: <defaults>
</compile_context>

<pallas_src>
import numpy as np
import jax
import jax.numpy as jnp
from jax.experimental import pallas as pl
from jax.experimental.pallas import tpu as pltpu


_LANE = 128   # vreg lane width: every slab piece / activation is 128 lanes wide
_SUB = 8      # f32 sublane granularity: every slab region starts on a multiple of 8


def _round_up(x, m):
    return (x + m - 1) // m * m


# -----------------------------------------------------------------------------
# One-time parameter packing (setup time, NOT in the forward path).
# -----------------------------------------------------------------------------
def pack_params(params):
    """Pack the 9 weight/bias tensors into one lane-padded f32 slab.

    Each piece occupies `round_up(load_rows, 8)` rows x 128 lanes, starting on
    an 8-row boundary.  Weights whose contraction runs against a 128-lane-wide
    activation (ws2, w1s, w2) are padded to 128 rows with zeros so every
    in-kernel matmul / load is full-lane dense and exactly equal to the
    unpadded math.
    Returns (slab, layout, dims): layout = 9 static row offsets + (S, C, 128),
    dims = (S, HS1, HS2, C, F) for cost estimation.
    """
    ws1, bs1, ws2, bs2, w1c, w1s, b1, w2, b2 = params
    S, HS1 = ws1.shape
    HS1b, HS2 = ws2.shape
    C, F = w1c.shape
    assert HS1b == HS1 and w1s.shape == (HS2, F) and w2.shape == (F, 1)
    assert HS1 <= _LANE and HS2 <= _LANE and F <= _LANE
    assert S % _SUB == 0 and C % _SUB == 0, \
        "state/cnn feature widths must be 8-aligned for dense loads"

    # (array(in, out), rows the kernel will load for the contraction)
    pieces = [
        (ws1, S),                        # critic_state L1 weight (contract = S)
        (np.reshape(bs1, (1, HS1)), 1),  # critic_state L1 bias
        (ws2, _LANE),                    # critic_state L2 weight (contract padded to 128)
        (np.reshape(bs2, (1, HS2)), 1),  # critic_state L2 bias
        (w1c, C),                        # v_net L1, cnn half   (contract = C)
        (w1s, _LANE),                    # v_net L1, state half (contract padded to 128)
        (np.reshape(b1, (1, F)), 1),     # v_net L1 bias
        (w2, _LANE),                     # value head (1 real output lane of 128)
        (np.reshape(b2, (1, 1)), 1),     # value head bias
    ]

    offsets, blocks, row = [], [], 0
    for arr, load_rows in pieces:
        region = _round_up(load_rows, _SUB)
        blk = np.zeros((region, _LANE), np.float32)
        r, c = arr.shape
        blk[:r, :c] = np.asarray(arr, np.float32)
        blocks.append(blk)
        offsets.append(row)
        row += region

    slab = jnp.asarray(np.concatenate(blocks, axis=0))   # (464, 128) at default sizes
    layout = tuple(offsets) + (S, C, _LANE)
    dims = (S, HS1, HS2, C, F)
    return slab, layout, dims


# -----------------------------------------------------------------------------
# Kernel: state-MLP (2 x tanh) -> concat-as-split-matmul -> Linear+tanh ->
#         lane-dense (tile_b, 128) padded value head (column 0 is real).
# -----------------------------------------------------------------------------
def _make_critic_kernel(layout):
    (r_ws1, r_bs1, r_ws2, r_bs2, r_w1c, r_w1s, r_b1, r_w2, r_b2,
     S, C, PAD) = layout

    def kernel(cnn_ref, state_ref, slab_ref, v_ref):
        # Static, 8/128-aligned carves of the packed weight slab (one DMA'd
        # input instead of nine).
        ws1 = slab_ref[r_ws1:r_ws1 + S, :]
        bs1 = slab_ref[r_bs1:r_bs1 + 1, :]
        ws2 = slab_ref[r_ws2:r_ws2 + PAD, :]
        bs2 = slab_ref[r_bs2:r_bs2 + 1, :]
        w1c = slab_ref[r_w1c:r_w1c + C, :]
        w1s = slab_ref[r_w1s:r_w1s + PAD, :]
        b1 = slab_ref[r_b1:r_b1 + 1, :]
        w2 = slab_ref[r_w2:r_w2 + PAD, :]
        b2 = slab_ref[r_b2:r_b2 + 1, :]

        # ----- critic_state MLP: Tanh(Linear) -> Tanh(Linear) -----
        # Padded lanes stay exactly 0 (zero weight cols, zero bias, tanh(0)=0).
        h = jnp.tanh(jnp.dot(state_ref[...], ws1,
                             preferred_element_type=jnp.float32) + bs1)
        h = jnp.tanh(jnp.dot(h, ws2,
                             preferred_element_type=jnp.float32) + bs2)

        # ----- torch.cat((cnn_output, h1), 1) then Linear == split matmul -----
        # Kept split: the cnn-branch dot has no dependence on the state MLP, so
        # the scheduler overlaps it with the tanh chain above.
        z = jnp.tanh(
            jnp.dot(cnn_ref[...], w1c, preferred_element_type=jnp.float32)
            + jnp.dot(h, w1s, preferred_element_type=jnp.float32)
            + b1)

        # ----- value head, padded to 128 output lanes: unmasked, lane-dense vst
        v_ref[...] = jnp.dot(z, w2, preferred_element_type=jnp.float32) + b2

    return kernel


# -----------------------------------------------------------------------------
# Forward wrapper.  Keep this under the caller's jit so the final [:, 0]
# slice (the squeeze(-1)) fuses with downstream consumers.
# -----------------------------------------------------------------------------
def img_state_critic(cnn_output, state_input, slab, layout, dims, *, tile_b=None):
    B, C = cnn_output.shape
    _, S = state_input.shape
    S_l, HS1, HS2, C_l, F = dims
    assert S == S_l and C == C_l

    # Batch tiling policy:
    #  * small B: whole batch in one grid step (per-step overhead dominates).
    #  * large B: >=2 grid steps so dimension_semantics=("parallel",) can
    #    shard across v7x's two TensorCores; tile capped so the double-buffered
    #    activations/output stay well inside v5e's 16 MiB default scoped VMEM.
    if tile_b is None:
        tile_b = B
        if B >= 256:
            t = B // 2
            while t > 2048:
                t //= 2
            if B % t == 0 and t % _SUB == 0:
                tile_b = t
    assert B % tile_b == 0
    assert tile_b == B or tile_b % _SUB == 0, \
        "tiled batch blocks must be 8-sublane aligned"
    grid = (B // tile_b,)

    kernel = _make_critic_kernel(layout)

    # Advisory cost estimate so XLA overlaps this microsecond-scale call.
    flops = 2 * B * (S * HS1 + HS1 * HS2 + (C + HS2) * F + F * _LANE)
    transcendentals = B * (HS1 + HS2 + F)
    bytes_accessed = 4 * (int(slab.size) + B * (C + S + _LANE))
    cost = pl.CostEstimate(flops=int(flops),
                           transcendentals=int(transcendentals),
                           bytes_accessed=int(bytes_accessed))

    batch_spec = lambda feat: pl.BlockSpec((tile_b, feat), lambda i: (i, 0))
    slab_spec = pl.BlockSpec(slab.shape, lambda i: (0, 0))

    # NOTE(v6e large-B): casting inputs + slab to bf16 halves DMA bytes; skipped
    # here (f32 kept) since it only matters once the kernel is DMA-bound.
    # NOTE(v5e large-B): the (B,128) padded output writes 128x the logical
    # bytes; an XLU-transpose pack would fix it but is irrelevant at these B.
    v_padded = pl.pallas_call(
        kernel,
        grid_spec=pltpu.PrefetchScalarGridSpec(
            num_scalar_prefetch=0,
            grid=grid,
            in_specs=[
                batch_spec(C),   # cnn_output
                batch_spec(S),   # state_input
                slab_spec,       # packed weights/biases (single DMA)
            ],
            out_specs=pl.BlockSpec((tile_b, _LANE), lambda i: (i, 0)),
        ),
        out_shape=jax.ShapeDtypeStruct((B, _LANE), jnp.float32),
        compiler_params=pltpu.CompilerParams(
            dimension_semantics=("parallel",)),  # no cross-batch carry
        cost_estimate=cost,
    )(cnn_output, state_input, slab)

    # torch.squeeze(v, -1): column 0 is the real value -> (B,)
    return v_padded[:, 0]


# -----------------------------------------------------------------------------
# Pure-JAX reference (mirrors the PyTorch forward exactly)
# -----------------------------------------------------------------------------
def reference(cnn_output, state_input, params):
    (ws1, bs1, ws2, bs2, w1c, w1s, b1, w2, b2) = params
    h1 = jnp.tanh(state_input @ ws1 + bs1)
    h1 = jnp.tanh(h1 @ ws2 + bs2)
    h2 = jnp.concatenate([cnn_output, h1], axis=1)
    w1 = jnp.concatenate([w1c, w1s], axis=0)
    z = jnp.tanh(h2 @ w1 + b1)
    v = z @ w2 + b2            # (B, 1)
    return v[:, 0]             # squeeze(-1)


if __name__ == "__main__":
    # Shapes consistent with the module's __init__:
    #   cnn_output_shape=32, state_input_shape=16, state_fc_size=(32, 32),
    #   cat_fc_size=64, activation=Tanh, batch=16.
    B, C, S = 16, 32, 16
    HS1, HS2, F = 32, 32, 64

    key = jax.random.PRNGKey(0)
    keys = jax.random.split(key, 14)

    def init(k, shape, scale=0.1):
        return scale * jax.random.normal(k, shape, dtype=jnp.float32)

    # Weights stored as (in, out); v_net's first Linear pre-split into the
    # cnn part (C, F) and state part (HS2, F) to avoid the in-kernel concat.
    params = (
        init(keys[0], (S, HS1)),   init(keys[1], (1, HS1)),      # critic_state L1
        init(keys[2], (HS1, HS2)), init(keys[3], (1, HS2)),      # critic_state L2
        init(keys[4], (C, F)),                                   # v_net L1 (cnn part)
        init(keys[5], (HS2, F)),                                 # v_net L1 (state part)
        init(keys[6], (1, F)),                                   # v_net L1 bias
        init(keys[7], (F, 1)),     init(keys[8], (1, 1)),        # v_net L2 (value head)
    )

    cnn_output = init(keys[9], (B, C), 1.0)
    state_input = init(keys[10], (B, S), 1.0)

    # One-time, setup-time packing (hoisted out of the forward path).
    slab, layout, dims = pack_params(params)

    # Forward is jitted so the final column-0 slice fuses with the call.
    fwd = jax.jit(lambda c, s, w: img_state_critic(c, s, w, layout, dims))

    # --- small-batch (single grid step) path ---
    v = fwd(cnn_output, state_input, slab)
    jax.block_until_ready(v)
    v_ref = reference(cnn_output, state_input, params)
    assert v.shape == (B,)
    assert jnp.allclose(v, v_ref, atol=1e-5, rtol=1e-5)

    # --- large-batch (grid >= 2, v7x megacore-shardable) path ---
    B2 = 512
    cnn2 = init(keys[11], (B2, C), 1.0)
    st2 = init(keys[12], (B2, S), 1.0)
    v2 = fwd(cnn2, st2, slab)
    jax.block_until_ready(v2)
    v2_ref = reference(cnn2, st2, params)
    assert v2.shape == (B2,)
    assert jnp.allclose(v2, v2_ref, atol=1e-5, rtol=1e-5)

    print("KERNEL_OK")
</pallas_src>

<mosaic_0001>
module attributes {stable_mosaic.version = 11 : i64} {
  func.func @kernel(%arg0: i32, %arg1: memref<16x32xf32, #tpu.memory_space<vmem>>, %arg2: memref<16x16xf32, #tpu.memory_space<vmem>>, %arg3: memref<464x128xf32, #tpu.memory_space<vmem>>, %arg4: memref<16x128xf32, #tpu.memory_space<vmem>>) attributes {dimension_semantics = [#tpu.dimension_semantics<parallel>], iteration_bounds = array<i64: 1>, scalar_prefetch = 0 : i64, scratch_operands = 0 : i64, tpu.core_type = #tpu.core_type<tc>, window_params = [{transform_indices = @transform_0, window_bounds = array<i64: 16, 32>}, {transform_indices = @transform_1, window_bounds = array<i64: 16, 16>}, {pipeline_mode = #tpu.pipeline_mode<synchronous>, transform_indices = @transform_2, window_bounds = array<i64: 464, 128>}, {transform_indices = @transform_3, window_bounds = array<i64: 16, 128>}]} {
    %c0 = arith.constant 0 : index
    %c0_0 = arith.constant 0 : index
    %0 = vector.load %arg3[%c0, %c0_0] : memref<464x128xf32, #tpu.memory_space<vmem>>, vector<16x128xf32>
    %c16 = arith.constant 16 : index
    %c0_1 = arith.constant 0 : index
    %1 = vector.load %arg3[%c16, %c0_1] : memref<464x128xf32, #tpu.memory_space<vmem>>, vector<1x128xf32>
    %c24 = arith.constant 24 : index
    %c0_2 = arith.constant 0 : index
    %2 = vector.load %arg3[%c24, %c0_2] : memref<464x128xf32, #tpu.memory_space<vmem>>, vector<128x128xf32>
    %c152 = arith.constant 152 : index
    %c0_3 = arith.constant 0 : index
    %3 = vector.load %arg3[%c152, %c0_3] : memref<464x128xf32, #tpu.memory_space<vmem>>, vector<1x128xf32>
    %c160 = arith.constant 160 : index
    %c0_4 = arith.constant 0 : index
    %4 = vector.load %arg3[%c160, %c0_4] : memref<464x128xf32, #tpu.memory_space<vmem>>, vector<32x128xf32>
    %c192 = arith.constant 192 : index
    %c0_5 = arith.constant 0 : index
    %5 = vector.load %arg3[%c192, %c0_5] : memref<464x128xf32, #tpu.memory_space<vmem>>, vector<128x128xf32>
    %c320 = arith.constant 320 : index
    %c0_6 = arith.constant 0 : index
    %6 = vector.load %arg3[%c320, %c0_6] : memref<464x128xf32, #tpu.memory_space<vmem>>, vector<1x128xf32>
    %c328 = arith.constant 328 : index
    %c0_7 = arith.constant 0 : index
    %7 = vector.load %arg3[%c328, %c0_7] : memref<464x128xf32, #tpu.memory_space<vmem>>, vector<128x128xf32>
    %c456 = arith.constant 456 : index
    %c0_8 = arith.constant 0 : index
    %8 = vector.load %arg3[%c456, %c0_8] : memref<464x128xf32, #tpu.memory_space<vmem>>, vector<1x128xf32>
    %c0_9 = arith.constant 0 : index
    %c0_10 = arith.constant 0 : index
    %9 = vector.load %arg2[%c0_9, %c0_10] : memref<16x16xf32, #tpu.memory_space<vmem>>, vector<16x16xf32>
    %cst = arith.constant dense<0.000000e+00> : vector<16x128xf32>
    %10 = tpu.matmul %9, %0, %cst {dimension_numbers = #tpu.dot_dimension_numbers<[1], [0], [0], [1], [0, 0, 1, 1], [], []>} : vector<16x16xf32>, vector<16x128xf32>, vector<16x128xf32> -> vector<16x128xf32>
    %11 = vector.broadcast %1 : vector<1x128xf32> to vector<16x128xf32>
    %12 = arith.addf %10, %11 : vector<16x128xf32>
    %13 = math.tanh %12 : vector<16x128xf32>
    %cst_11 = arith.constant dense<0.000000e+00> : vector<16x128xf32>
    %14 = tpu.matmul %13, %2, %cst_11 {dimension_numbers = #tpu.dot_dimension_numbers<[1], [0], [0], [1], [0, 0, 1, 1], [], []>} : vector<16x128xf32>, vector<128x128xf32>, vector<16x128xf32> -> vector<16x128xf32>
    %15 = vector.broadcast %3 : vector<1x128xf32> to vector<16x128xf32>
    %16 = arith.addf %14, %15 : vector<16x128xf32>
    %17 = math.tanh %16 : vector<16x128xf32>
    %c0_12 = arith.constant 0 : index
    %c0_13 = arith.constant 0 : index
    %18 = vector.load %arg1[%c0_12, %c0_13] : memref<16x32xf32, #tpu.memory_space<vmem>>, vector<16x32xf32>
    %cst_14 = arith.constant dense<0.000000e+00> : vector<16x128xf32>
    %19 = tpu.matmul %18, %4, %cst_14 {dimension_numbers = #tpu.dot_dimension_numbers<[1], [0], [0], [1], [0, 0, 1, 1], [], []>} : vector<16x32xf32>, vector<32x128xf32>, vector<16x128xf32> -> vector<16x128xf32>
    %cst_15 = arith.constant dense<0.000000e+00> : vector<16x128xf32>
    %20 = tpu.matmul %17, %5, %cst_15 {dimension_numbers = #tpu.dot_dimension_numbers<[1], [0], [0], [1], [0, 0, 1, 1], [], []>} : vector<16x128xf32>, vector<128x128xf32>, vector<16x128xf32> -> vector<16x128xf32>
    %21 = arith.addf %19, %20 : vector<16x128xf32>
    %22 = vector.broadcast %6 : vector<1x128xf32> to vector<16x128xf32>
    %23 = arith.addf %21, %22 : vector<16x128xf32>
    %24 = math.tanh %23 : vector<16x128xf32>
    %cst_16 = arith.constant dense<0.000000e+00> : vector<16x128xf32>
    %25 = tpu.matmul %24, %7, %cst_16 {dimension_numbers = #tpu.dot_dimension_numbers<[1], [0], [0], [1], [0, 0, 1, 1], [], []>} : vector<16x128xf32>, vector<128x128xf32>, vector<16x128xf32> -> vector<16x128xf32>
    %26 = vector.broadcast %8 : vector<1x128xf32> to vector<16x128xf32>
    %27 = arith.addf %25, %26 : vector<16x128xf32>
    %c0_17 = arith.constant 0 : index
    %c0_18 = arith.constant 0 : index
    %28 = vector.load %arg4[%c0_17, %c0_18] : memref<16x128xf32, #tpu.memory_space<vmem>>, vector<16x128xf32>
    tpu.vector_store %arg4[%c0_17, %c0_18], %27 {strides = array<i32>} : memref<16x128xf32, #tpu.memory_space<vmem>>, vector<16x128xf32>,
    return
  }
  func.func @transform_0(%arg0: i32) -> (i32, i32) {
    %c0_i32 = arith.constant 0 : i32
    %c0_i32_0 = arith.constant 0 : i32
    return %arg0, %c0_i32 : i32, i32
  }
  func.func @transform_1(%arg0: i32) -> (i32, i32) {
    %c0_i32 = arith.constant 0 : i32
    %c0_i32_0 = arith.constant 0 : i32
    return %arg0, %c0_i32 : i32, i32
  }
  func.func @transform_2(%arg0: i32) -> (i32, i32) {
    %c0_i32 = arith.constant 0 : i32
    %c0_i32_0 = arith.constant 0 : i32
    %c0_i32_1 = arith.constant 0 : i32
    return %c0_i32, %c0_i32_0 : i32, i32
  }
  func.func @transform_3(%arg0: i32) -> (i32, i32) {
    %c0_i32 = arith.constant 0 : i32
    %c0_i32_0 = arith.constant 0 : i32
    return %arg0, %c0_i32 : i32, i32
  }
}

</mosaic_0001>

<llo_original>
// kernel: _lambda_.1
$region0: #{_lambda_.1}
  #allocation0 [shape = 'u32[]', space=smem, size = 0x4, offset = 0x4, fixed_abs, tag = 'smem constant byte address 0x4 - core index']
  #allocation1 [shape = 'u32[144,128]{1,0:T(1,128)}', space=vmem, size = 0x12000, scoped, tag = 'internal scratch']
  %s0 = inlined_call_operand.hbm [shape: f32[16,32], index: 0, kind: input, shape index: {}]
  %s1 = inlined_call_operand.hbm [shape: f32[16,16], index: 1, kind: input, shape index: {}]
  %s2 = inlined_call_operand.hbm [shape: f32[464,128], index: 2, kind: input, shape index: {}]
  %s3 = inlined_call_operand.vmem [shape: f32[16,128], index: 3, kind: output, shape index: {}]
  %s4 = sld [smem:[#allocation0]]
  $region34: #{_lambda_.1} parent=0
    _
  %s6 = ssub.s32 1, %s4
  %s7 = scalar_select 0, %s6, %s4
  $region1: #{_lambda_.1} parent=0
    #allocation2 [shape = 'u8[8192]{0}', space=vmem, size = 0x2000, scoped, tag = 'input window, operand 0, single buffered']
    #allocation3 [shape = 's32[1]{0}', space=sflag, size = 0x4, scoped, tag = 'scoped memory for _lambda_.1']
    #allocation4 [shape = 'u8[8192]{0}', space=vmem, size = 0x2000, scoped, tag = 'input window, operand 1, single buffered']
    #allocation5 [shape = 's32[1]{0}', space=sflag, size = 0x4, scoped, tag = 'scoped memory for _lambda_.1']
    #allocation6 [shape = 'u8[237568]{0}', space=vmem, size = 0x3a000, scoped, tag = 'input window, operand 2, single buffered']
    %8 = vsyncpa [#allocation3], 0
    %9 = vsyncpa [#allocation5], 0
    // Predicated region
    $region2: #{_lambda_.1} parent=1 // pred_check
      _
    $region3: #{_lambda_.1} parent=1 // pred_check_branch
      %11 = sbr.rel (0) target = $region5
    $region4: #{_lambda_.1} parent=1 // pred_region
      %s13 = ssub.s32 256, 256
      %14 = vsyncadd [#allocation3], %s13
      %s15 = sshll.u32 [#allocation2], 4
      %s16 = int_to_ptr.vmem [resolvable:$true] %s15
      %21 = dma.hbm_to_vmem [thread:$0]  %s0, 256, %s16, [#allocation3], 128, 128, 8
    $region5: #{_lambda_.1} parent=1 // pred_fallthru
      _
    // Predicated region
    $region6: #{_lambda_.1} parent=1 // pred_check
      _
    $region7: #{_lambda_.1} parent=1 // pred_check_branch
      %23 = sbr.rel (0) target = $region9
    $region8: #{_lambda_.1} parent=1 // pred_region
      %s25 = ssub.s32 256, 256
      %26 = vsyncadd [#allocation5], %s25
      %s27 = sshll.u32 [#allocation4], 4
      %s28 = int_to_ptr.vmem [resolvable:$true] %s27
      %33 = dma.hbm_to_vmem [thread:$0]  %s1, 256, %s28, [#allocation5], 128, 128, 8
    $region9: #{_lambda_.1} parent=1 // pred_fallthru
      _
    // Predicated region
    $region10: #{_lambda_.1} parent=1 // pred_check
      _
    $region11: #{_lambda_.1} parent=1 // pred_check_branch
      %35 = sbr.rel (0) target = $region13
    $region12: #{_lambda_.1} parent=1 // pred_region
      %s37 = ssub.s32 7424, 7424
      %38 = vsyncadd [#allocation5], %s37
      %s39 = sshll.u32 [#allocation6], 4
      %s40 = int_to_ptr.vmem [resolvable:$true] %s39
      %45 = dma.hbm_to_vmem [thread:$0]  %s2, 7424, %s40, [#allocation5], 128, 128, 8
    $region13: #{_lambda_.1} parent=1 // pred_fallthru
      _
    // Predicated region
    $region14: #{_lambda_.1} parent=1 // pred_check
      _
    $region15: #{_lambda_.1} parent=1 // pred_check_branch
      %47 = sbr.rel (0) target = $region17
    $region16: #{_lambda_.1} parent=1 // pred_region
      %48 = dma.done [#allocation3], 256
    $region17: #{_lambda_.1} parent=1 // pred_fallthru
      _
    // Predicated region
    $region18: #{_lambda_.1} parent=1 // pred_check
      _
    $region19: #{_lambda_.1} parent=1 // pred_check_branch
      %50 = sbr.rel (0) target = $region21
    $region20: #{_lambda_.1} parent=1 // pred_region
      %51 = dma.done [#allocation5], 256
    $region21: #{_lambda_.1} parent=1 // pred_fallthru
      _
    // Predicated region
    $region22: #{_lambda_.1} parent=1 // pred_check
      _
    $region23: #{_lambda_.1} parent=1 // pred_check_branch
      %53 = sbr.rel (0) target = $region25
    $region24: #{_lambda_.1} parent=1 // pred_region
      %54 = dma.done [#allocation5], 7424
    $region25: #{_lambda_.1} parent=1 // pred_fallthru
      _
    %v55 = vld [vmem:[#allocation6] sm:$0xff]
    %v56 = vld [vmem:[#allocation6 + $0x8] sm:$0xff]
    %v57 = vld [vmem:[#allocation6 + $0x10] sm:$0x1]
    %v58 = vld [vmem:[#allocation6 + $0x18] sm:$0xff]
    %v59 = vld [vmem:[#allocation6 + $0x20] sm:$0xff]
    %v60 = vld [vmem:[#allocation6 + $0x28] sm:$0xff]
    %v61 = vld [vmem:[#allocation6 + $0x30] sm:$0xff]
    %v62 = vld [vmem:[#allocation6 + $0x38] sm:$0xff]
    %v63 = vld [vmem:[#allocation6 + $0x40] sm:$0xff]
    %v64 = vld [vmem:[#allocation6 + $0x48] sm:$0xff]
    %v65 = vld [vmem:[#allocation6 + $0x50] sm:$0xff]
    %v66 = vld [vmem:[#allocation6 + $0x58] sm:$0xff]
    %v67 = vld [vmem:[#allocation6 + $0x60] sm:$0xff]
    %v68 = vld [vmem:[#allocation6 + $0x68] sm:$0xff]
    %v69 = vld [vmem:[#allocation6 + $0x70] sm:$0xff]
    %v70 = vld [vmem:[#allocation6 + $0x78] sm:$0xff]
    %v71 = vld [vmem:[#allocation6 + $0x80] sm:$0xff]
    %v72 = vld [vmem:[#allocation6 + $0x88] sm:$0xff]
    %v73 = vld [vmem:[#allocation6 + $0x90] sm:$0xff]
    %v74 = vld [vmem:[#allocation6 + $0x98] sm:$0x1]
    %v75 = vld [vmem:[#allocation6 + $0xa0] sm:$0xff]
    %v76 = vld [vmem:[#allocation6 + $0xa8] sm:$0xff]
    %v77 = vld [vmem:[#allocation6 + $0xb0] sm:$0xff]
    %v78 = vld [vmem:[#allocation6 + $0xb8] sm:$0xff]
    %v79 = vld [vmem:[#allocation6 + $0xc0] sm:$0xff]
    %v80 = vld [vmem:[#allocation6 + $0xc8] sm:$0xff]
    %v81 = vld [vmem:[#allocation6 + $0xd0] sm:$0xff]
    %v82 = vld [vmem:[#allocation6 + $0xd8] sm:$0xff]
    %v83 = vld [vmem:[#allocation6 + $0xe0] sm:$0xff]
    %v84 = vld [vmem:[#allocation6 + $0xe8] sm:$0xff]
    %v85 = vld [vmem:[#allocation6 + $0xf0] sm:$0xff]
    %v86 = vld [vmem:[#allocation6 + $0xf8] sm:$0xff]
    %v87 = vld [vmem:[#allocation6 + $0x100] sm:$0xff]
    %v88 = vld [vmem:[#allocation6 + $0x108] sm:$0xff]
    %v89 = vld [vmem:[#allocation6 + $0x110] sm:$0xff]
    %v90 = vld [vmem:[#allocation6 + $0x118] sm:$0xff]
    %v91 = vld [vmem:[#allocation6 + $0x120] sm:$0xff]
    %v92 = vld [vmem:[#allocation6 + $0x128] sm:$0xff]
    %v93 = vld [vmem:[#allocation6 + $0x130] sm:$0xff]
    %v94 = vld [vmem:[#allocation6 + $0x138] sm:$0xff]
    %v95 = vld [vmem:[#allocation6 + $0x140] sm:$0x1]
    %v96 = vld [vmem:[#allocation6 + $0x148] sm:$0xff]
    %v97 = vld [vmem:[#allocation6 + $0x150] sm:$0xff]
    %v98 = vld [vmem:[#allocation6 + $0x158] sm:$0xff]
    %v99 = vld [vmem:[#allocation6 + $0x160] sm:$0xff]
    %v100 = vld [vmem:[#allocation6 + $0x168] sm:$0xff]
    %v101 = vld [vmem:[#allocation6 + $0x170] sm:$0xff]
    %v102 = vld [vmem:[#allocation6 + $0x178] sm:$0xff]
    %v103 = vld [vmem:[#allocation6 + $0x180] sm:$0xff]
    %v104 = vld [vmem:[#allocation6 + $0x188] sm:$0xff]
    %v105 = vld [vmem:[#allocation6 + $0x190] sm:$0xff]
    %v106 = vld [vmem:[#allocation6 + $0x198] sm:$0xff]
    %v107 = vld [vmem:[#allocation6 + $0x1a0] sm:$0xff]
    %v108 = vld [vmem:[#allocation6 + $0x1a8] sm:$0xff]
    %v109 = vld [vmem:[#allocation6 + $0x1b0] sm:$0xff]
    %v110 = vld [vmem:[#allocation6 + $0x1b8] sm:$0xff]
    %v111 = vld [vmem:[#allocation6 + $0x1c0] sm:$0xff]
    %v112 = vld [vmem:[#allocation6 + $0x1c8] sm:$0x1]
    %v113 = vld [vmem:[#allocation4] sm:$0xff]
    %v114 = vld [vmem:[#allocation4 + $0x8] sm:$0xff]
    %v115 = vlaneseq
    %v116 = vshrl.u32 %v115, 7
    %v117 = vsub.s32 0, %v116
    %v118 = vrot.slane %v57, %v117
    %vm119 = vcmask 130048
    %v121 = vsel %vm119, %v113, 0
    %v124 = vsel %vm119, %v114, 0
    %126 = vmatprep.subr.mxu0 0.0
    %127 = vmatpush1.msra.mxu0 %v55
    %128 = vmatprep.subr.mxu0 0.0
    %129 = vmatpush1.msra.mxu0 %v56
    %130 = vmatprep.subr.mxu0 0.0
    %131 = vmatpush1.msra.mxu0 0.0
    %132 = vmatprep.subr.mxu0 0.0
    %133 = vmatpush1.msra.mxu0 0.0
    %134 = vmatprep.subr.mxu0 0.0
    %135 = vmatpush1.msra.mxu0 0.0
    %136 = vmatprep.subr.mxu0 0.0
    %137 = vmatpush1.msra.mxu0 0.0
    %138 = vmatprep.subr.mxu0 0.0
    %139 = vmatpush1.msra.mxu0 0.0
    %140 = vmatprep.subr.mxu0 0.0
    %141 = vmatpush1.msra.mxu0 0.0
    %142 = vmatprep.subr.mxu0 0.0
    %143 = vmatpush1.msra.mxu0 0.0
    %144 = vmatprep.subr.mxu0 0.0
    %145 = vmatpush1.msra.mxu0 0.0
    %146 = vmatprep.subr.mxu0 0.0
    %147 = vmatpush1.msra.mxu0 0.0
    %148 = vmatprep.subr.mxu0 0.0
    %149 = vmatpush1.msra.mxu0 0.0
    %150 = vmatprep.subr.mxu0 0.0
    %151 = vmatpush1.msra.mxu0 0.0
    %152 = vmatprep.subr.mxu0 0.0
    %153 = vmatpush1.msra.mxu0 0.0
    %154 = vmatprep.subr.mxu0 0.0
    %155 = vmatpush1.msra.mxu0 0.0
    %156 = vmatprep.subr.mxu0 0.0
    %157 = vmatpush1.msra.mxu0 0.0
    %158 = vmatprep.subr.mxu0 0.0
    %159 = vmatpush1.msra.mxu0 0.0
    %160 = vmatprep.subr.mxu0 0.0
    %161 = vmatpush1.msra.mxu0 0.0
    %162 = vmatprep.subr.mxu0 0.0
    %163 = vmatpush1.msra.mxu0 0.0
    %164 = vmatprep.subr.mxu0 0.0
    %165 = vmatpush1.msra.mxu0 0.0
    %166 = vmatprep.subr.mxu0 0.0
    %167 = vmatpush1.msra.mxu0 0.0
    %168 = vmatprep.subr.mxu0 0.0
    %169 = vmatpush1.msra.mxu0 0.0
    %170 = vmatprep.subr.mxu0 0.0
    %171 = vmatpush1.msra.mxu0 0.0
    %172 = vmatprep.subr.mxu0 0.0
    %173 = vmatpush1.msra.mxu0 0.0
    %174 = vmatprep.subr.mxu0 0.0
    %175 = vmatpush1.msra.mxu0 0.0
    %176 = vmatprep.subr.mxu0 0.0
    %177 = vmatpush1.msra.mxu0 0.0
    %178 = vmatprep.subr.mxu0 0.0
    %179 = vmatpush1.msra.mxu0 0.0
    %180 = vmatprep.subr.mxu0 0.0
    %181 = vmatpush1.msra.mxu0 0.0
    %182 = vmatprep.subr.mxu0 0.0
    %183 = vmatpush1.msra.mxu0 0.0
    %184 = vmatprep.subr.mxu0 0.0
    %185 = vmatpush1.msra.mxu0 0.0
    %186 = vmatprep.subr.mxu0 0.0
    %187 = vmatpush1.msra.mxu0 0.0
    %188 = vmatprep.subr.mxu0 0.0
    %189 = vmatpush1.msra.mxu0 0.0
    %190 = vmatprep.mubr.f32.mxu0 0.0
    %191 = vmatmul.mubr.f32.gmra.mrb[0].mxu0 %v121
    %v192 = vpop.f32.mrb[0].mxu0
    %v193 = vadd.f32 %v118, %v192
    %v194 = vpop.f32.mrb[0].mxu0
    %195 = vmatprep.mubr.f32.mxu0 0.0
    %196 = vmatmul.mubr.f32.gmra.mrb[0].mxu0 %v124
    %v197 = vpop.f32.mrb[0].mxu0
    %v198 = vadd.f32 %v118, %v197
    %v199 = vpop.f32.mrb[0].mxu0
    %200 = vdwg.mxu0
    %v201 = vtanh.pop %v193
    %v202 = vtanh.pop %v198
    %v203 = vlaneseq
    %v204 = vshrl.u32 %v203, 7
    %v205 = vsub.s32 0, %v204
    %v206 = vrot.slane %v74, %v205
    %207 = vmatprep.subr.mxu0 0.0
    %208 = vmatpush1.msra.mxu0 %v58
    %209 = vmatprep.subr.mxu0 0.0
    %210 = vmatpush1.msra.mxu0 %v59
    %211 = vmatprep.subr.mxu0 0.0
    %212 = vmatpush1.msra.mxu0 %v60
    %213 = vmatprep.subr.mxu0 0.0
    %214 = vmatpush1.msra.mxu0 %v61
    %215 = vmatprep.subr.mxu0 0.0
    %216 = vmatpush1.msra.mxu0 %v62
    %217 = vmatprep.subr.mxu0 0.0
    %218 = vmatpush1.msra.mxu0 %v63
    %219 = vmatprep.subr.mxu0 0.0
    %220 = vmatpush1.msra.mxu0 %v64
    %221 = vmatprep.subr.mxu0 0.0
    %222 = vmatpush1.msra.mxu0 %v65
    %223 = vmatprep.subr.mxu0 0.0
    %224 = vmatpush1.msra.mxu0 %v66
    %225 = vmatprep.subr.mxu0 0.0
    %226 = vmatpush1.msra.mxu0 %v67
    %227 = vmatprep.subr.mxu0 0.0
    %228 = vmatpush1.msra.mxu0 %v68
    %229 = vmatprep.subr.mxu0 0.0
    %230 = vmatpush1.msra.mxu0 %v69
    %231 = vmatprep.subr.mxu0 0.0
    %232 = vmatpush1.msra.mxu0 %v70
    %233 = vmatprep.subr.mxu0 0.0
    %234 = vmatpush1.msra.mxu0 %v71
    %235 = vmatprep.subr.mxu0 0.0
    %236 = vmatpush1.msra.mxu0 %v72
    %237 = vmatprep.subr.mxu0 0.0
    %238 = vmatpush1.msra.mxu0 %v73
    %239 = vmatprep.subr.mxu0 0.0
    %240 = vmatpush1.msra.mxu0 0.0
    %241 = vmatprep.subr.mxu0 0.0
    %242 = vmatpush1.msra.mxu0 0.0
    %243 = vmatprep.subr.mxu0 0.0
    %244 = vmatpush1.msra.mxu0 0.0
    %245 = vmatprep.subr.mxu0 0.0
    %246 = vmatpush1.msra.mxu0 0.0
    %247 = vmatprep.subr.mxu0 0.0
    %248 = vmatpush1.msra.mxu0 0.0
    %249 = vmatprep.subr.mxu0 0.0
    %250 = vmatpush1.msra.mxu0 0.0
    %251 = vmatprep.subr.mxu0 0.0
    %252 = vmatpush1.msra.mxu0 0.0
    %253 = vmatprep.subr.mxu0 0.0
    %254 = vmatpush1.msra.mxu0 0.0
    %255 = vmatprep.subr.mxu0 0.0
    %256 = vmatpush1.msra.mxu0 0.0
    %257 = vmatprep.subr.mxu0 0.0
    %258 = vmatpush1.msra.mxu0 0.0
    %259 = vmatprep.subr.mxu0 0.0
    %260 = vmatpush1.msra.mxu0 0.0
    %261 = vmatprep.subr.mxu0 0.0
    %262 = vmatpush1.msra.mxu0 0.0
    %263 = vmatprep.subr.mxu0 0.0
    %264 = vmatpush1.msra.mxu0 0.0
    %265 = vmatprep.subr.mxu0 0.0
    %266 = vmatpush1.msra.mxu0 0.0
    %267 = vmatprep.subr.mxu0 0.0
    %268 = vmatpush1.msra.mxu0 0.0
    %269 = vmatprep.subr.mxu0 0.0
    %270 = vmatpush1.msra.mxu0 0.0
    %271 = vmatprep.mubr.f32.mxu0 0.0
    %272 = vmatmul.mubr.f32.gmra.mrb[0].mxu0 %v201
    %v273 = vpop.f32.mrb[0].mxu0
    %v274 = vadd.f32 %v206, %v273
    %v275 = vpop.f32.mrb[0].mxu0
    %276 = vmatprep.mubr.f32.mxu0 0.0
    %277 = vmatmul.mubr.f32.gmra.mrb[0].mxu0 %v202
    %v278 = vpop.f32.mrb[0].mxu0
    %v279 = vadd.f32 %v206, %v278
    %v280 = vpop.f32.mrb[0].mxu0
    %281 = vdwg.mxu0
    %v282 = vtanh.pop %v274
    %v283 = vtanh.pop %v279
    %v284 = vld [vmem:[#allocation2] sm:$0xff]
    %v285 = vld [vmem:[#allocation2 + $0x8] sm:$0xff]
    %286 = vmatprep.subr.mxu0 0.0
    %287 = vmatpush1.msra.mxu0 %v79
    %288 = vmatprep.subr.mxu0 0.0
    %289 = vmatpush1.msra.mxu0 %v80
    %290 = vmatprep.subr.mxu0 0.0
    %291 = vmatpush1.msra.mxu0 %v81
    %292 = vmatprep.subr.mxu0 0.0
    %293 = vmatpush1.msra.mxu0 %v82
    %294 = vmatprep.subr.mxu0 0.0
    %295 = vmatpush1.msra.mxu0 %v83
    %296 = vmatprep.subr.mxu0 0.0
    %297 = vmatpush1.msra.mxu0 %v84
    %298 = vmatprep.subr.mxu0 0.0
    %299 = vmatpush1.msra.mxu0 %v85
    %300 = vmatprep.subr.mxu0 0.0
    %301 = vmatpush1.msra.mxu0 %v86
    %302 = vmatprep.subr.mxu0 0.0
    %303 = vmatpush1.msra.mxu0 %v87
    %304 = vmatprep.subr.mxu0 0.0
    %305 = vmatpush1.msra.mxu0 %v88
    %306 = vmatprep.subr.mxu0 0.0
    %307 = vmatpush1.msra.mxu0 %v89
    %308 = vmatprep.subr.mxu0 0.0
    %309 = vmatpush1.msra.mxu0 %v90
    %310 = vmatprep.subr.mxu0 0.0
    %311 = vmatpush1.msra.mxu0 %v91
    %312 = vmatprep.subr.mxu0 0.0
    %313 = vmatpush1.msra.mxu0 %v92
    %314 = vmatprep.subr.mxu0 0.0
    %315 = vmatpush1.msra.mxu0 %v93
    %316 = vmatprep.subr.mxu0 0.0
    %317 = vmatpush1.msra.mxu0 %v94
    %318 = vmatprep.subr.mxu0 0.0
    %319 = vmatpush1.msra.mxu0 0.0
    %320 = vmatprep.subr.mxu0 0.0
    %321 = vmatpush1.msra.mxu0 0.0
    %322 = vmatprep.subr.mxu0 0.0
    %323 = vmatpush1.msra.mxu0 0.0
    %324 = vmatprep.subr.mxu0 0.0
    %325 = vmatpush1.msra.mxu0 0.0
    %326 = vmatprep.subr.mxu0 0.0
    %327 = vmatpush1.msra.mxu0 0.0
    %328 = vmatprep.subr.mxu0 0.0
    %329 = vmatpush1.msra.mxu0 0.0
    %330 = vmatprep.subr.mxu0 0.0
    %331 = vmatpush1.msra.mxu0 0.0
    %332 = vmatprep.subr.mxu0 0.0
    %333 = vmatpush1.msra.mxu0 0.0
    %334 = vmatprep.subr.mxu0 0.0
    %335 = vmatpush1.msra.mxu0 0.0
    %336 = vmatprep.subr.mxu0 0.0
    %337 = vmatpush1.msra.mxu0 0.0
    %338 = vmatprep.subr.mxu0 0.0
    %339 = vmatpush1.msra.mxu0 0.0
    %340 = vmatprep.subr.mxu0 0.0
    %341 = vmatpush1.msra.mxu0 0.0
    %342 = vmatprep.subr.mxu0 0.0
    %343 = vmatpush1.msra.mxu0 0.0
    %344 = vmatprep.subr.mxu0 0.0
    %345 = vmatpush1.msra.mxu0 0.0
    %346 = vmatprep.subr.mxu0 0.0
    %347 = vmatpush1.msra.mxu0 0.0
    %348 = vmatprep.subr.mxu0 0.0
    %349 = vmatpush1.msra.mxu0 0.0
    %350 = vmatprep.mubr.f32.mxu0 0.0
    %351 = vmatmul.mubr.f32.gmra.mrb[0].mxu0 %v282
    %v352 = vpop.f32.mrb[0].mxu0
    %v353 = vadd.f32 0.0, %v352
    %v354 = vpop.f32.mrb[0].mxu0
    %355 = vmatprep.mubr.f32.mxu0 0.0
    %356 = vmatmul.mubr.f32.gmra.mrb[0].mxu0 %v283
    %v357 = vpop.f32.mrb[0].mxu0
    %v358 = vadd.f32 0.0, %v357
    %v359 = vpop.f32.mrb[0].mxu0
    %360 = vdwg.mxu0
    %vm361 = vcmask 261120
    %v363 = vsel %vm361, %v284, 0
    %v366 = vsel %vm361, %v285, 0
    %368 = vmatprep.subr.mxu0 0.0
    %369 = vmatpush1.msra.mxu0 %v75
    %370 = vmatprep.subr.mxu0 0.0
    %371 = vmatpush1.msra.mxu0 %v76
    %372 = vmatprep.subr.mxu0 0.0
    %373 = vmatpush1.msra.mxu0 %v77
    %374 = vmatprep.subr.mxu0 0.0
    %375 = vmatpush1.msra.mxu0 %v78
    %376 = vmatprep.subr.mxu0 0.0
    %377 = vmatpush1.msra.mxu0 0.0
    %378 = vmatprep.subr.mxu0 0.0
    %379 = vmatpush1.msra.mxu0 0.0
    %380 = vmatprep.subr.mxu0 0.0
    %381 = vmatpush1.msra.mxu0 0.0
    %382 = vmatprep.subr.mxu0 0.0
    %383 = vmatpush1.msra.mxu0 0.0
    %384 = vmatprep.subr.mxu0 0.0
    %385 = vmatpush1.msra.mxu0 0.0
    %386 = vmatprep.subr.mxu0 0.0
    %387 = vmatpush1.msra.mxu0 0.0
    %388 = vmatprep.subr.mxu0 0.0
    %389 = vmatpush1.msra.mxu0 0.0
    %390 = vmatprep.subr.mxu0 0.0
    %391 = vmatpush1.msra.mxu0 0.0
    %392 = vmatprep.subr.mxu0 0.0
    %393 = vmatpush1.msra.mxu0 0.0
    %394 = vmatprep.subr.mxu0 0.0
    %395 = vmatpush1.msra.mxu0 0.0
    %396 = vmatprep.subr.mxu0 0.0
    %397 = vmatpush1.msra.mxu0 0.0
    %398 = vmatprep.subr.mxu0 0.0
    %399 = vmatpush1.msra.mxu0 0.0
    %400 = vmatprep.subr.mxu0 0.0
    %401 = vmatpush1.msra.mxu0 0.0
    %402 = vmatprep.subr.mxu0 0.0
    %403 = vmatpush1.msra.mxu0 0.0
    %404 = vmatprep.subr.mxu0 0.0
    %405 = vmatpush1.msra.mxu0 0.0
    %406 = vmatprep.subr.mxu0 0.0
    %407 = vmatpush1.msra.mxu0 0.0
    %408 = vmatprep.subr.mxu0 0.0
    %409 = vmatpush1.msra.mxu0 0.0
    %410 = vmatprep.subr.mxu0 0.0
    %411 = vmatpush1.msra.mxu0 0.0
    %412 = vmatprep.subr.mxu0 0.0
    %413 = vmatpush1.msra.mxu0 0.0
    %414 = vmatprep.subr.mxu0 0.0
    %415 = vmatpush1.msra.mxu0 0.0
    %416 = vmatprep.subr.mxu0 0.0
    %417 = vmatpush1.msra.mxu0 0.0
    %418 = vmatprep.subr.mxu0 0.0
    %419 = vmatpush1.msra.mxu0 0.0
    %420 = vmatprep.subr.mxu0 0.0
    %421 = vmatpush1.msra.mxu0 0.0
    %422 = vmatprep.subr.mxu0 0.0
    %423 = vmatpush1.msra.mxu0 0.0
    %424 = vmatprep.subr.mxu0 0.0
    %425 = vmatpush1.msra.mxu0 0.0
    %426 = vmatprep.subr.mxu0 0.0
    %427 = vmatpush1.msra.mxu0 0.0
    %428 = vmatprep.subr.mxu0 0.0
    %429 = vmatpush1.msra.mxu0 0.0
    %430 = vmatprep.subr.mxu0 0.0
    %431 = vmatpush1.msra.mxu0 0.0
    %432 = vmatprep.mubr.f32.mxu0 0.0
    %433 = vmatmul.mubr.f32.gmra.mrb[0].mxu0 %v363
    %v434 = vpop.f32.mrb[0].mxu0
    %v435 = vadd.f32 %v353, %v434
    %v436 = vpop.f32.mrb[0].mxu0
    %437 = vmatprep.mubr.f32.mxu0 0.0
    %438 = vmatmul.mubr.f32.gmra.mrb[0].mxu0 %v366
    %v439 = vpop.f32.mrb[0].mxu0
    %v440 = vadd.f32 %v358, %v439
    %v441 = vpop.f32.mrb[0].mxu0
    %442 = vdwg.mxu0
    %v443 = vlaneseq
    %v444 = vshrl.u32 %v443, 7
    %v445 = vsub.s32 0, %v444
    %v446 = vrot.slane %v95, %v445
    %v447 = vadd.f32 %v435, %v446
    %v448 = vadd.f32 %v440, %v446
    %v449 = vtanh.pop %v447
    %v450 = vtanh.pop %v448
    %v451 = vlaneseq
    %v452 = vshrl.u32 %v451, 7
    %v453 = vsub.s32 0, %v452
    %v454 = vrot.slane %v112, %v453
    %455 = vmatprep.subr.mxu0 0.0
    %456 = vmatpush1.msra.mxu0 %v96
    %457 = vmatprep.subr.mxu0 0.0
    %458 = vmatpush1.msra.mxu0 %v97
    %459 = vmatprep.subr.mxu0 0.0
    %460 = vmatpush1.msra.mxu0 %v98
    %461 = vmatprep.subr.mxu0 0.0
    %462 = vmatpush1.msra.mxu0 %v99
    %463 = vmatprep.subr.mxu0 0.0
    %464 = vmatpush1.msra.mxu0 %v100
    %465 = vmatprep.subr.mxu0 0.0
    %466 = vmatpush1.msra.mxu0 %v101
    %467 = vmatprep.subr.mxu0 0.0
    %468 = vmatpush1.msra.mxu0 %v102
    %469 = vmatprep.subr.mxu0 0.0
    %470 = vmatpush1.msra.mxu0 %v103
    %471 = vmatprep.subr.mxu0 0.0
    %472 = vmatpush1.msra.mxu0 %v104
    %473 = vmatprep.subr.mxu0 0.0
    %474 = vmatpush1.msra.mxu0 %v105
    %475 = vmatprep.subr.mxu0 0.0
    %476 = vmatpush1.msra.mxu0 %v106
    %477 = vmatprep.subr.mxu0 0.0
    %478 = vmatpush1.msra.mxu0 %v107
    %479 = vmatprep.subr.mxu0 0.0
    %480 = vmatpush1.msra.mxu0 %v108
    %481 = vmatprep.subr.mxu0 0.0
    %482 = vmatpush1.msra.mxu0 %v109
    %483 = vmatprep.subr.mxu0 0.0
    %484 = vmatpush1.msra.mxu0 %v110
    %485 = vmatprep.subr.mxu0 0.0
    %486 = vmatpush1.msra.mxu0 %v111
    %487 = vmatprep.subr.mxu0 0.0
    %488 = vmatpush1.msra.mxu0 0.0
    %489 = vmatprep.subr.mxu0 0.0
    %490 = vmatpush1.msra.mxu0 0.0
    %491 = vmatprep.subr.mxu0 0.0
    %492 = vmatpush1.msra.mxu0 0.0
    %493 = vmatprep.subr.mxu0 0.0
    %494 = vmatpush1.msra.mxu0 0.0
    %495 = vmatprep.subr.mxu0 0.0
    %496 = vmatpush1.msra.mxu0 0.0
    %497 = vmatprep.subr.mxu0 0.0
    %498 = vmatpush1.msra.mxu0 0.0
    %499 = vmatprep.subr.mxu0 0.0
    %500 = vmatpush1.msra.mxu0 0.0
    %501 = vmatprep.subr.mxu0 0.0
    %502 = vmatpush1.msra.mxu0 0.0
    %503 = vmatprep.subr.mxu0 0.0
    %504 = vmatpush1.msra.mxu0 0.0
    %505 = vmatprep.subr.mxu0 0.0
    %506 = vmatpush1.msra.mxu0 0.0
    %507 = vmatprep.subr.mxu0 0.0
    %508 = vmatpush1.msra.mxu0 0.0
    %509 = vmatprep.subr.mxu0 0.0
    %510 = vmatpush1.msra.mxu0 0.0
    %511 = vmatprep.subr.mxu0 0.0
    %512 = vmatpush1.msra.mxu0 0.0
    %513 = vmatprep.subr.mxu0 0.0
    %514 = vmatpush1.msra.mxu0 0.0
    %515 = vmatprep.subr.mxu0 0.0
    %516 = vmatpush1.msra.mxu0 0.0
    %517 = vmatprep.subr.mxu0 0.0
    %518 = vmatpush1.msra.mxu0 0.0
    %519 = vmatprep.mubr.f32.mxu0 0.0
    %520 = vmatmul.mubr.f32.gmra.mrb[0].mxu0 %v449
    %v521 = vpop.f32.mrb[0].mxu0
    %v522 = vadd.f32 %v454, %v521
    %v523 = vpop.f32.mrb[0].mxu0
    %524 = vmatprep.mubr.f32.mxu0 0.0
    %525 = vmatmul.mubr.f32.gmra.mrb[0].mxu0 %v450
    %v526 = vpop.f32.mrb[0].mxu0
    %v527 = vadd.f32 %v454, %v526
    %v528 = vpop.f32.mrb[0].mxu0
    %529 = vdwg.mxu0
    %530 = vst [vmem:[%s3] sm:$0xff] %v522
    %531 = vst [vmem:[%s3 + $0x8] sm:$0xff] %v527
    // Predicated region
    $region26: #{_lambda_.1} parent=1 // pred_check
      _
    $region27: #{_lambda_.1} parent=1 // pred_check_branch
      %533 = sbr.rel (0) target = $region29
    $region28: #{_lambda_.1} parent=1 // pred_region
      _
    $region29: #{_lambda_.1} parent=1 // pred_fallthru
      _
    // Predicated region
    $region30: #{_lambda_.1} parent=1 // pred_check
      _
    $region31: #{_lambda_.1} parent=1 // pred_check_branch
      %535 = sbr.rel (0) target = $region33
    $region32: #{_lambda_.1} parent=1 // pred_region
      _
    $region33: #{_lambda_.1} parent=1 // pred_fallthru
      _
    %536 = vsyncpa [#allocation3], 1
    %537 = vsyncpa [#allocation5], 1

</llo_original>
